<compile_context>
chip_gen: v6e
topology: v6e:2x2x1
jax: 0.10.0
libtpu: 0.0.40
codegen_flags: <defaults>
</compile_context>

<pallas_src>
import jax
import jax.numpy as jnp
import numpy as np
from jax import lax
from jax.experimental import pallas as pl
from jax.experimental.pallas import tpu as pltpu


def _conv1d_kernel(ph_ref, w_ref, b_ref, out_ref):
    # ph_ref : (1, stride, C_in, L_phase)  phase-split padded input, one batch element
    # w_ref  : (K, C_out, C_in)            conv weight, tap-major
    # b_ref  : (C_out, 1)                  conv bias (per-sublane column)
    # out_ref: (1, C_out, L_out)           channel-first output (lane-dense on L_out)
    _, c_out, l_out = out_ref.shape
    k_taps = w_ref.shape[0]
    stride = ph_ref.shape[1]

    acc = jnp.zeros((c_out, l_out), jnp.float32)
    for k in range(k_taps):                       # static unroll; K is small
        r, q = k % stride, k // stride
        xk = ph_ref[0, r, :, pl.ds(q, l_out)]     # (C_in, L_out), static slice
        acc = acc + jnp.dot(w_ref[k], xk, preferred_element_type=jnp.float32)
    out_ref[0] = (acc + b_ref[...]).astype(out_ref.dtype)


def _conv1d_pallas(x_pad, w, b, *, stride):
    """Cross-correlation (torch Conv1d semantics) of an already-padded input.

    x_pad: (B, C_in, L_pad)   w: (C_out, C_in, K)   b: (C_out,)
    Returns (B, C_out, L_out) in float32, channel-first (matches torch NCL).
    """
    B, C_in, L_pad = x_pad.shape
    C_out, _, K = w.shape
    L_out = (L_pad - K) // stride + 1

    # Phase decomposition: x_pad[b, c, p*stride + r] == phases[b, r, c, p].
    # Total size == size of x_pad (no im2col blow-up); all in-kernel slices are static.
    L_phase = -(-L_pad // stride)
    xp = jnp.pad(x_pad, ((0, 0), (0, 0), (0, L_phase * stride - L_pad)))
    phases = xp.reshape(B, C_in, L_phase, stride).transpose(0, 3, 1, 2)

    w_taps = jnp.transpose(w, (2, 0, 1))          # (K, C_out, C_in)
    b_col = b.reshape(C_out, 1)

    # TODO(synk): very long signals would want an extra L_out-tiled grid axis
    # (256/512-lane tiles) with halo handling; one batch element per step here.
    return pl.pallas_call(
        _conv1d_kernel,
        out_shape=jax.ShapeDtypeStruct((B, C_out, L_out), jnp.float32),
        grid_spec=pltpu.PrefetchScalarGridSpec(
            num_scalar_prefetch=0,
            grid=(B,),
            in_specs=[
                pl.BlockSpec((1, stride, C_in, L_phase), lambda bb: (bb, 0, 0, 0)),
                pl.BlockSpec((K, C_out, C_in),           lambda bb: (0, 0, 0)),
                pl.BlockSpec((C_out, 1),                 lambda bb: (0, 0)),
            ],
            out_specs=pl.BlockSpec((1, C_out, L_out), lambda bb: (bb, 0, 0)),
        ),
        compiler_params=pltpu.CompilerParams(
            dimension_semantics=("parallel",)),
    )(phases, w_taps, b_col)


def up_first_last_forward(x, conv_w, conv_b, convT_w, convT_b, *,
                          kernel_size, stride, padding, output_padding, upsample):
    """Forward pass of `up_first_last`. x: (B, C_in, L) channel-first (NCL)."""
    if upsample:
        # Upsample(nearest, integer scale) -> ConstantPad1d(k//2, value=0) -> Conv1d(stride)
        rp = kernel_size // 2
        x_up = jnp.repeat(x, int(upsample), axis=-1)        # nearest-neighbor upsample
        x_pad = jnp.pad(x_up, ((0, 0), (0, 0), (rp, rp)))   # zero pad (despite "reflection" name)
        return _conv1d_pallas(x_pad, conv_w, conv_b, stride=stride)
    else:
        # ConvTranspose1d == zero-dilate by `stride`, pad (K-1-p, K-1-p+output_padding),
        # then stride-1 cross-correlation with the spatially flipped, channel-swapped weight.
        K = convT_w.shape[-1]
        assert padding <= K - 1, "ConvTranspose1d padding must be <= kernel_size - 1"
        B, C_in, L = x.shape
        L_dil = (L - 1) * stride + 1
        x_dil = jnp.zeros((B, C_in, L_dil), x.dtype).at[:, :, ::stride].set(x)
        pad_l = K - 1 - padding
        pad_r = K - 1 - padding + output_padding
        x_pad = jnp.pad(x_dil, ((0, 0), (0, 0), (pad_l, pad_r)))
        w_eff = jnp.transpose(jnp.flip(convT_w, axis=-1), (1, 0, 2))  # (C_out, C_in, K)
        return _conv1d_pallas(x_pad, w_eff, convT_b, stride=1)


if __name__ == "__main__":
    key = jax.random.PRNGKey(0)
    ks = jax.random.split(key, 7)

    B, C_in, C_out, L = 2, 4, 8, 16
    x = jax.random.normal(ks[0], (B, C_in, L), jnp.float32)

    # ---------- branch 1: upsample path (Upsample -> pad -> Conv1d, stride=1) ----------
    K1, stride1, scale = 5, 1, 2
    conv_w = jax.random.normal(ks[1], (C_out, C_in, K1), jnp.float32) * 0.1
    conv_b = jax.random.normal(ks[2], (C_out,), jnp.float32) * 0.1

    out1 = up_first_last_forward(
        x, conv_w, conv_b, None, None,
        kernel_size=K1, stride=stride1, padding=11, output_padding=1, upsample=scale)
    out1 = jax.block_until_ready(out1)

    rp1 = K1 // 2
    ref1 = lax.conv_general_dilated(
        jnp.repeat(x, scale, axis=-1), conv_w, (stride1,), [(rp1, rp1)],
        dimension_numbers=("NCH", "OIH", "NCH")) + conv_b[None, :, None]
    np.testing.assert_allclose(np.asarray(out1), np.asarray(ref1), rtol=1e-5, atol=1e-5)

    # ---------- branch 1 with a strided Conv1d (exercises the stride>1 phase path) ----------
    K2, stride2 = 4, 2
    conv_w2 = jax.random.normal(ks[3], (C_out, C_in, K2), jnp.float32) * 0.1
    conv_b2 = jax.random.normal(ks[4], (C_out,), jnp.float32) * 0.1

    out2 = up_first_last_forward(
        x, conv_w2, conv_b2, None, None,
        kernel_size=K2, stride=stride2, padding=11, output_padding=1, upsample=scale)
    out2 = jax.block_until_ready(out2)

    rp2 = K2 // 2
    ref2 = lax.conv_general_dilated(
        jnp.repeat(x, scale, axis=-1), conv_w2, (stride2,), [(rp2, rp2)],
        dimension_numbers=("NCH", "OIH", "NCH")) + conv_b2[None, :, None]
    np.testing.assert_allclose(np.asarray(out2), np.asarray(ref2), rtol=1e-5, atol=1e-5)

    # ---------- branch 2: ConvTranspose1d path (upsample=None) ----------
    K3, stride3, pad3, opad3 = 5, 2, 2, 1
    convT_w = jax.random.normal(ks[5], (C_in, C_out, K3), jnp.float32) * 0.1  # torch layout (C_in, C_out, K)
    convT_b = jax.random.normal(ks[6], (C_out,), jnp.float32) * 0.1

    out3 = up_first_last_forward(
        x, None, None, convT_w, convT_b,
        kernel_size=K3, stride=stride3, padding=pad3, output_padding=opad3, upsample=None)
    out3 = jax.block_until_ready(out3)

    ref3 = lax.conv_general_dilated(
        x, jnp.transpose(jnp.flip(convT_w, -1), (1, 0, 2)), (1,),
        [(K3 - 1 - pad3, K3 - 1 - pad3 + opad3)], lhs_dilation=(stride3,),
        dimension_numbers=("NCH", "OIH", "NCH")) + convT_b[None, :, None]
    np.testing.assert_allclose(np.asarray(out3), np.asarray(ref3), rtol=1e-5, atol=1e-5)

    print("KERNEL_OK")
</pallas_src>

<mosaic_0001>
module attributes {stable_mosaic.version = 11 : i64} {
  func.func @_conv1d_kernel(%arg0: i32, %arg1: memref<1x1x4x36xf32, #tpu.memory_space<vmem>>, %arg2: memref<5x8x4xf32, #tpu.memory_space<vmem>>, %arg3: memref<8x1xf32, #tpu.memory_space<vmem>>, %arg4: memref<1x8x32xf32, #tpu.memory_space<vmem>>) attributes {dimension_semantics = [#tpu.dimension_semantics<parallel>], iteration_bounds = array<i64: 2>, scalar_prefetch = 0 : i64, scratch_operands = 0 : i64, tpu.core_type = #tpu.core_type<tc>, window_params = [{transform_indices = @transform_0, window_bounds = array<i64: 1, 1, 4, 36>}, {pipeline_mode = #tpu.pipeline_mode<synchronous>, transform_indices = @transform_1, window_bounds = array<i64: 5, 8, 4>}, {pipeline_mode = #tpu.pipeline_mode<synchronous>, transform_indices = @transform_2, window_bounds = array<i64: 8, 1>}, {transform_indices = @transform_3, window_bounds = array<i64: 1, 8, 32>}]} {
    %cst = arith.constant 0.000000e+00 : f32
    %0 = vector.broadcast %cst : f32 to vector<8x32xf32>
    %c0 = arith.constant 0 : index
    %c0_0 = arith.constant 0 : index
    %c0_1 = arith.constant 0 : index
    %c0_2 = arith.constant 0 : index
    %1 = vector.load %arg1[%c0, %c0_0, %c0_1, %c0_2] : memref<1x1x4x36xf32, #tpu.memory_space<vmem>>, vector<1x1x4x32xf32>
    %2 = vector.shape_cast %1 : vector<1x1x4x32xf32> to vector<4x32xf32>
    %c0_3 = arith.constant 0 : index
    %c0_4 = arith.constant 0 : index
    %c0_5 = arith.constant 0 : index
    %3 = vector.load %arg2[%c0_3, %c0_4, %c0_5] : memref<5x8x4xf32, #tpu.memory_space<vmem>>, vector<1x8x4xf32>
    %4 = vector.shape_cast %3 : vector<1x8x4xf32> to vector<8x4xf32>
    %cst_6 = arith.constant dense<0.000000e+00> : vector<8x32xf32>
    %5 = tpu.matmul %4, %2, %cst_6 {dimension_numbers = #tpu.dot_dimension_numbers<[1], [0], [0], [1], [0, 0, 1, 1], [], []>} : vector<8x4xf32>, vector<4x32xf32>, vector<8x32xf32> -> vector<8x32xf32>
    %6 = arith.addf %0, %5 : vector<8x32xf32>
    %c0_7 = arith.constant 0 : index
    %c0_8 = arith.constant 0 : index
    %c0_9 = arith.constant 0 : index
    %c1 = arith.constant 1 : index
    %7 = vector.load %arg1[%c0_7, %c0_8, %c0_9, %c1] : memref<1x1x4x36xf32, #tpu.memory_space<vmem>>, vector<1x1x4x32xf32>
    %8 = vector.shape_cast %7 : vector<1x1x4x32xf32> to vector<4x32xf32>
    %c1_10 = arith.constant 1 : index
    %c0_11 = arith.constant 0 : index
    %c0_12 = arith.constant 0 : index
    %9 = vector.load %arg2[%c1_10, %c0_11, %c0_12] : memref<5x8x4xf32, #tpu.memory_space<vmem>>, vector<1x8x4xf32>
    %10 = vector.shape_cast %9 : vector<1x8x4xf32> to vector<8x4xf32>
    %cst_13 = arith.constant dense<0.000000e+00> : vector<8x32xf32>
    %11 = tpu.matmul %10, %8, %cst_13 {dimension_numbers = #tpu.dot_dimension_numbers<[1], [0], [0], [1], [0, 0, 1, 1], [], []>} : vector<8x4xf32>, vector<4x32xf32>, vector<8x32xf32> -> vector<8x32xf32>
    %12 = arith.addf %6, %11 : vector<8x32xf32>
    %c0_14 = arith.constant 0 : index
    %c0_15 = arith.constant 0 : index
    %c0_16 = arith.constant 0 : index
    %c2 = arith.constant 2 : index
    %13 = vector.load %arg1[%c0_14, %c0_15, %c0_16, %c2] : memref<1x1x4x36xf32, #tpu.memory_space<vmem>>, vector<1x1x4x32xf32>
    %14 = vector.shape_cast %13 : vector<1x1x4x32xf32> to vector<4x32xf32>
    %c2_17 = arith.constant 2 : index
    %c0_18 = arith.constant 0 : index
    %c0_19 = arith.constant 0 : index
    %15 = vector.load %arg2[%c2_17, %c0_18, %c0_19] : memref<5x8x4xf32, #tpu.memory_space<vmem>>, vector<1x8x4xf32>
    %16 = vector.shape_cast %15 : vector<1x8x4xf32> to vector<8x4xf32>
    %cst_20 = arith.constant dense<0.000000e+00> : vector<8x32xf32>
    %17 = tpu.matmul %16, %14, %cst_20 {dimension_numbers = #tpu.dot_dimension_numbers<[1], [0], [0], [1], [0, 0, 1, 1], [], []>} : vector<8x4xf32>, vector<4x32xf32>, vector<8x32xf32> -> vector<8x32xf32>
    %18 = arith.addf %12, %17 : vector<8x32xf32>
    %c0_21 = arith.constant 0 : index
    %c0_22 = arith.constant 0 : index
    %c0_23 = arith.constant 0 : index
    %c3 = arith.constant 3 : index
    %19 = vector.load %arg1[%c0_21, %c0_22, %c0_23, %c3] : memref<1x1x4x36xf32, #tpu.memory_space<vmem>>, vector<1x1x4x32xf32>
    %20 = vector.shape_cast %19 : vector<1x1x4x32xf32> to vector<4x32xf32>
    %c3_24 = arith.constant 3 : index
    %c0_25 = arith.constant 0 : index
    %c0_26 = arith.constant 0 : index
    %21 = vector.load %arg2[%c3_24, %c0_25, %c0_26] : memref<5x8x4xf32, #tpu.memory_space<vmem>>, vector<1x8x4xf32>
    %22 = vector.shape_cast %21 : vector<1x8x4xf32> to vector<8x4xf32>
    %cst_27 = arith.constant dense<0.000000e+00> : vector<8x32xf32>
    %23 = tpu.matmul %22, %20, %cst_27 {dimension_numbers = #tpu.dot_dimension_numbers<[1], [0], [0], [1], [0, 0, 1, 1], [], []>} : vector<8x4xf32>, vector<4x32xf32>, vector<8x32xf32> -> vector<8x32xf32>
    %24 = arith.addf %18, %23 : vector<8x32xf32>
    %c0_28 = arith.constant 0 : index
    %c0_29 = arith.constant 0 : index
    %c0_30 = arith.constant 0 : index
    %c4 = arith.constant 4 : index
    %25 = vector.load %arg1[%c0_28, %c0_29, %c0_30, %c4] : memref<1x1x4x36xf32, #tpu.memory_space<vmem>>, vector<1x1x4x32xf32>
    %26 = vector.shape_cast %25 : vector<1x1x4x32xf32> to vector<4x32xf32>
    %c4_31 = arith.constant 4 : index
    %c0_32 = arith.constant 0 : index
    %c0_33 = arith.constant 0 : index
    %27 = vector.load %arg2[%c4_31, %c0_32, %c0_33] : memref<5x8x4xf32, #tpu.memory_space<vmem>>, vector<1x8x4xf32>
    %28 = vector.shape_cast %27 : vector<1x8x4xf32> to vector<8x4xf32>
    %cst_34 = arith.constant dense<0.000000e+00> : vector<8x32xf32>
    %29 = tpu.matmul %28, %26, %cst_34 {dimension_numbers = #tpu.dot_dimension_numbers<[1], [0], [0], [1], [0, 0, 1, 1], [], []>} : vector<8x4xf32>, vector<4x32xf32>, vector<8x32xf32> -> vector<8x32xf32>
    %30 = arith.addf %24, %29 : vector<8x32xf32>
    %c0_35 = arith.constant 0 : index
    %c0_36 = arith.constant 0 : index
    %31 = vector.load %arg3[%c0_35, %c0_36] : memref<8x1xf32, #tpu.memory_space<vmem>>, vector<8x1xf32>
    %32 = vector.broadcast %31 : vector<8x1xf32> to vector<8x32xf32>
    %33 = arith.addf %30, %32 : vector<8x32xf32>
    %c0_37 = arith.constant 0 : index
    %c0_38 = arith.constant 0 : index
    %c0_39 = arith.constant 0 : index
    %34 = vector.load %arg4[%c0_37, %c0_38, %c0_39] : memref<1x8x32xf32, #tpu.memory_space<vmem>>, vector<1x8x32xf32>
    %35 = vector.shape_cast %34 : vector<1x8x32xf32> to vector<8x32xf32>
    %36 = vector.shape_cast %33 : vector<8x32xf32> to vector<1x8x32xf32>
    tpu.vector_store %arg4[%c0_37, %c0_38, %c0_39], %36 {strides = array<i32>} : memref<1x8x32xf32, #tpu.memory_space<vmem>>, vector<1x8x32xf32>,
    return
  }
  func.func @transform_0(%arg0: i32) -> (i32, i32, i32, i32) {
    %c0_i32 = arith.constant 0 : i32
    %c0_i32_0 = arith.constant 0 : i32
    %c0_i32_1 = arith.constant 0 : i32
    %c0_i32_2 = arith.constant 0 : i32
    return %arg0, %c0_i32, %c0_i32_0, %c0_i32_1 : i32, i32, i32, i32
  }
  func.func @transform_1(%arg0: i32) -> (i32, i32, i32) {
    %c0_i32 = arith.constant 0 : i32
    %c0_i32_0 = arith.constant 0 : i32
    %c0_i32_1 = arith.constant 0 : i32
    %c0_i32_2 = arith.constant 0 : i32
    return %c0_i32, %c0_i32_0, %c0_i32_1 : i32, i32, i32
  }
  func.func @transform_2(%arg0: i32) -> (i32, i32) {
    %c0_i32 = arith.constant 0 : i32
    %c0_i32_0 = arith.constant 0 : i32
    %c0_i32_1 = arith.constant 0 : i32
    return %c0_i32, %c0_i32_0 : i32, i32
  }
  func.func @transform_3(%arg0: i32) -> (i32, i32, i32) {
    %c0_i32 = arith.constant 0 : i32
    %c0_i32_0 = arith.constant 0 : i32
    %c0_i32_1 = arith.constant 0 : i32
    return %arg0, %c0_i32, %c0_i32_0 : i32, i32, i32
  }
}

</mosaic_0001>

<llo_original>
// kernel: tpu_custom_call.1
$region0: #{tpu_custom_call.1}
  #allocation0 [shape = 'u32[]', space=smem, size = 0x4, offset = 0x4, fixed_abs, tag = 'smem constant byte address 0x4 - core index']
  #allocation1 [shape = 'u32[144,128]{1,0:T(1,128)}', space=vmem, size = 0x12000, scoped, tag = 'internal scratch']
  %s0 = inlined_call_operand.vmem [shape: f32[2,1,4,36], index: 0, kind: input, shape index: {}]
  %s1 = inlined_call_operand.vmem [shape: f32[5,8,4], index: 1, kind: input, shape index: {}]
  %s2 = inlined_call_operand.vmem [shape: f32[8,1], index: 2, kind: input, shape index: {}]
  %s3 = inlined_call_operand.hbm [shape: f32[2,8,32], index: 3, kind: output, shape index: {}]
  %s4 = sld [smem:[#allocation0]]
  $region45: #{tpu_custom_call.1} parent=0
    _
  %s6 = ssub.s32 1, %s4
  %s7 = scalar_select 0, %s6, %s4
  $region1: #{tpu_custom_call.1} parent=0
    #allocation2 [shape = 'u8[8192]{0}', space=vmem, size = 0x2000, scoped, tag = 'output window, operand 0']
    #allocation3 [shape = 's32[2]{0}', space=sflag, size = 0x8, scoped, tag = 'scoped memory for tpu_custom_call.1']
    %8 = vsyncpa [#allocation3], 0
    %s9 = scalar_lea.sflag [#allocation3], 1
    %10 = vsyncpa %s9, 0
    loop: start=0, step=1, limit=4
    $region2: #{tpu_custom_call.1} parent=1 // loop_pre_header
      _
    $region3: #{tpu_custom_call.1} parent=1 // loop_header
      %s12 = sphi 0, %s16
      %p13 = scmp.ge.s32.totalorder %s12, 4
      %s22 = sphi 0, %s24
      %s25 = sphi 0, %s22
      %s26 = sphi 0, %s25
      %s42 = sphi 0, %s26
      %s46 = sphi 0, %s46
      %s48 = sphi 0, %s46
      %s49 = sphi 0, %s48
      %s63 = sphi 0, %s49
      %s67 = sphi 0, %s67
      %s69 = sphi 0, %s67
      %s70 = sphi 0, %s69
      %s84 = sphi 0, %s70
      %s90 = sphi 0, %s92
      %s93 = sphi 0, %s90
      %s94 = sphi 0, %s93
      %s110 = sphi 0, %s94
    $region4: #{tpu_custom_call.1} parent=1 // loop_header_branch
      %15 = sbr.rel (%p13) target = $region8
    $region5: #{tpu_custom_call.1} parent=1 // loop_body
      %s17 = ssub.s32 %s12, 1
      %s18 = ssub.s32 %s12, 2
      %s19 = sadd.s32 %s12, 1
      %s20 = ssub.s32 %s12, %s19
      %p21 = scmp.eq.s32.totalorder %s20, 0
      %s23 = sadd.s32 %s22, 1
      %s24 = scalar_select %p21, %s22, %s23
      %p27 = pneg %p21
      %p28 = scmp.eq.s32.totalorder %s12, 1
      %p29 = por %p27, %p28
      %p30 = scmp.ne.s32.totalorder %s22, %s25
      %p31 = scmp.eq.s32.totalorder %s12, 0
      %p32 = por %p30, %p31
      %p33 = scmp.ne.s32.totalorder %s22, %s25
      %p34 = scmp.eq.s32.totalorder %s17, 1
      %p35 = por %p33, %p34
      %p36 = scmp.ne.s32.totalorder %s25, %s26
      %p37 = scmp.eq.s32.totalorder %s17, 0
      %p38 = por %p36, %p37
      %p39 = scmp.ne.s32.totalorder %s25, %s26
      %p40 = scmp.eq.s32.totalorder %s18, 1
      %p41 = por %p39, %p40
      %p43 = scmp.ne.s32.totalorder %s26, %s42
      %p44 = scmp.eq.s32.totalorder %s18, 0
      %p45 = por %p43, %p44
      %s47 = sadd.s32 %s46, 1
      %p50 = scmp.eq.s32.totalorder %s12, 1
      %p51 = scmp.ne.s32.totalorder %s46, %s48
      %p52 = scmp.eq.s32.totalorder %s12, 0
      %p53 = por %p51, %p52
      %p54 = scmp.ne.s32.totalorder %s46, %s48
      %p55 = scmp.eq.s32.totalorder %s17, 1
      %p56 = por %p54, %p55
      %p57 = scmp.ne.s32.totalorder %s48, %s49
      %p58 = scmp.eq.s32.totalorder %s17, 0
      %p59 = por %p57, %p58
      %p60 = scmp.ne.s32.totalorder %s48, %s49
      %p61 = scmp.eq.s32.totalorder %s18, 1
      %p62 = por %p60, %p61
      %p64 = scmp.ne.s32.totalorder %s49, %s63
      %p65 = scmp.eq.s32.totalorder %s18, 0
      %p66 = por %p64, %p65
      %s68 = sadd.s32 %s67, 1
      %p71 = scmp.eq.s32.totalorder %s12, 1
      %p72 = scmp.ne.s32.totalorder %s67, %s69
      %p73 = scmp.eq.s32.totalorder %s12, 0
      %p74 = por %p72, %p73
      %p75 = scmp.ne.s32.totalorder %s67, %s69
      %p76 = scmp.eq.s32.totalorder %s17, 1
      %p77 = por %p75, %p76
      %p78 = scmp.ne.s32.totalorder %s69, %s70
      %p79 = scmp.eq.s32.totalorder %s17, 0
      %p80 = por %p78, %p79
      %p81 = scmp.ne.s32.totalorder %s69, %s70
      %p82 = scmp.eq.s32.totalorder %s18, 1
      %p83 = por %p81, %p82
      %p85 = scmp.ne.s32.totalorder %s70, %s84
      %p86 = scmp.eq.s32.totalorder %s18, 0
      %p87 = por %p85, %p86
      %s88 = ssub.s32 %s12, %s19
      %p89 = scmp.eq.s32.totalorder %s88, 0
      %s91 = sadd.s32 %s90, 1
      %s92 = scalar_select %p89, %s90, %s91
      %p95 = pneg %p89
      %p96 = scmp.eq.s32.totalorder %s12, 1
      %p97 = por %p95, %p96
      %p98 = scmp.ne.s32.totalorder %s90, %s93
      %p99 = scmp.eq.s32.totalorder %s12, 0
      %p100 = por %p98, %p99
      %p101 = scmp.ne.s32.totalorder %s90, %s93
      %p102 = scmp.eq.s32.totalorder %s17, 1
      %p103 = por %p101, %p102
      %p104 = scmp.ne.s32.totalorder %s93, %s94
      %p105 = scmp.eq.s32.totalorder %s17, 0
      %p106 = por %p104, %p105
      %p107 = scmp.ne.s32.totalorder %s93, %s94
      %p108 = scmp.eq.s32.totalorder %s18, 1
      %p109 = por %p107, %p108
      %p111 = scmp.ne.s32.totalorder %s94, %s110
      %p112 = scmp.eq.s32.totalorder %s18, 0
      %p113 = por %p111, %p112
      %p114 = scmp.le.s32.totalorder 1, %s12
      %p115 = scmp.lt.s32.totalorder %s12, 3
      %p116 = pnand %p114, %p115
      %p117 = pneg %p116
      // Predicated region
      $region9: #{tpu_custom_call.1} parent=5 // pred_check
        _
      $region10: #{tpu_custom_call.1} parent=5 // pred_check_branch
        %119 = sbr.rel (%p116) target = $region12
      $region11: #{tpu_custom_call.1} parent=5 // pred_region
        %s120 = ssub.s32 %s12, 1
        // Predicated region
        $region13: #{tpu_custom_call.1} parent=11 // pred_check
          %p121 = pneg %p59
        $region14: #{tpu_custom_call.1} parent=11 // pred_check_branch
          %123 = sbr.rel (%p121) target = $region16
        $region15: #{tpu_custom_call.1} parent=11 // pred_region
          _
        $region16: #{tpu_custom_call.1} parent=11 // pred_fallthru
          _
        // Predicated region
        $region17: #{tpu_custom_call.1} parent=11 // pred_check
          %p124 = pneg %p80
        $region18: #{tpu_custom_call.1} parent=11 // pred_check_branch
          %126 = sbr.rel (%p124) target = $region20
        $region19: #{tpu_custom_call.1} parent=11 // pred_region
          _
        $region20: #{tpu_custom_call.1} parent=11 // pred_fallthru
          _
      $region12: #{tpu_custom_call.1} parent=5 // pred_fallthru
        _
      %p127 = scmp.lt.s32.totalorder %s12, 2
      // Predicated region
      $region21: #{tpu_custom_call.1} parent=5 // pred_check
        %p128 = pneg %p127
      $region22: #{tpu_custom_call.1} parent=5 // pred_check_branch
        %130 = sbr.rel (%p128) target = $region24
      $region23: #{tpu_custom_call.1} parent=5 // pred_region
        // Predicated region
        $region25: #{tpu_custom_call.1} parent=23 // pred_check
          %p131 = pneg %p32
        $region26: #{tpu_custom_call.1} parent=23 // pred_check_branch
          %133 = sbr.rel (%p131) target = $region28
        $region27: #{tpu_custom_call.1} parent=23 // pred_region
          %p134 = scmp.lt.s32.totalorder %s12, 1
          %s135 = scalar_select %p134, %s12, 1
          %s136 = smul.addr %s135, 4
          %s137 = scalar_lea.vmem %s0, %s136
        $region28: #{tpu_custom_call.1} parent=23 // pred_fallthru
          _
      $region24: #{tpu_custom_call.1} parent=5 // pred_fallthru
        _
      %p138 = scmp.le.s32.totalorder 1, %s12
      %p139 = scmp.lt.s32.totalorder %s12, 3
      %p140 = pnand %p138, %p139
      %p141 = pneg %p140
      // Predicated region
      $region29: #{tpu_custom_call.1} parent=5 // pred_check
        _
      $region30: #{tpu_custom_call.1} parent=5 // pred_check_branch
        %143 = sbr.rel (%p140) target = $region32
      $region31: #{tpu_custom_call.1} parent=5 // pred_region
        %s144 = ssub.s32 %s12, 1
        %p145 = scmp.lt.s32.totalorder %s17, 1
        %s146 = scalar_select %p145, %s17, 1
        %s147 = smul.addr %s146, 4
        %s148 = scalar_lea.vmem %s0, %s147
        %p149 = pneg %p38
        %p150 = pneg %p35
        %p151 = pneg %p59
        %p152 = pneg %p56
        %p153 = pneg %p80
        %p154 = pneg %p77
        %p155 = pneg %p106
        %p156 = pneg %p103
        %s157 = sand.u32 %s93, 1
        %s158 = scalar_lea.sflag [#allocation3], %s157
        %s159 = sand.u32 %s93, 1
        %s160 = smul.addr %s159, 8
        %s161 = scalar_lea.vmem [#allocation2], %s160
        %p162 = scmp.lt.s32.totalorder %s17, 1
        %s163 = scalar_select %p162, %s17, 1
        %s164 = smul.addr %s163, 4
        %s165 = scalar_lea.vmem %s0, %s164
        %v166 = vld [vmem:[%s165] sm:$0xf]
        %v167 = vld [vmem:[%s1] sm:$0xff]
        %s168 = scalar_lea.vmem %s1, 8
        %v169 = vld [vmem:[%s168] sm:$0xff]
        %171 = vrot.lane.b32.xlu0 %v166, 127
        %v172 = vpop.permute.xlu0 %171
        %vm173 = vcmask 31744
        %v175 = vsel %vm173, %v169, 0
        %vm177 = vcmask 1043456
        %v178 = vsel %vm177, %v172, 0
        %180 = vmatprep.subr.mxu0 0.0
        %181 = vmatpush1.msra.mxu0 0.0
        %182 = vmatprep.subr.mxu0 0.0
        %183 = vmatpush1.msra.mxu0 0.0
        %184 = vmatprep.subr.mxu0 0.0
        %185 = vmatpush1.msra.mxu0 0.0
        %186 = vmatprep.subr.mxu0 0.0
        %187 = vmatpush1.msra.mxu0 0.0
        %188 = vmatprep.subr.mxu0 0.0
        %189 = vmatpush1.msra.mxu0 0.0
        %190 = vmatprep.subr.mxu0 0.0
        %191 = vmatpush1.msra.mxu0 0.0
        %192 = vmatprep.subr.mxu0 0.0
        %193 = vmatpush1.msra.mxu0 0.0
        %194 = vmatprep.subr.mxu0 0.0
        %195 = vmatpush1.msra.mxu0 0.0
        %196 = vmatprep.subr.mxu0 0.0
        %197 = vmatpush1.msra.mxu0 0.0
        %198 = vmatprep.subr.mxu0 0.0
        %199 = vmatpush1.msra.mxu0 0.0
        %200 = vmatprep.subr.mxu0 0.0
        %201 = vmatpush1.msra.mxu0 0.0
        %202 = vmatprep.subr.mxu0 0.0
        %203 = vmatpush1.msra.mxu0 0.0
        %204 = vmatprep.subr.mxu0 0.0
        %205 = vmatpush1.msra.mxu0 0.0
        %206 = vmatprep.subr.mxu0 0.0
        %207 = vmatpush1.msra.mxu0 0.0
        %208 = vmatprep.subr.mxu0 0.0
        %209 = vmatpush1.msra.mxu0 0.0
        %210 = vmatprep.subr.mxu0 0.0
        %211 = vmatpush1.msra.mxu0 %v178
        %212 = vmatprep.subr.mxu0 0.0
        %213 = vmatpush2.msra.mxu0 0.0
        %214 = vmatprep.subr.mxu0 0.0
        %215 = vmatpush2.msra.mxu0 0.0
        %216 = vmatprep.subr.mxu0 0.0
        %217 = vmatpush2.msra.mxu0 0.0
        %218 = vmatprep.subr.mxu0 0.0
        %219 = vmatpush2.msra.mxu0 0.0
        %220 = vmatprep.subr.mxu0 0.0
        %221 = vmatpush2.msra.mxu0 0.0
        %222 = vmatprep.subr.mxu0 0.0
        %223 = vmatpush2.msra.mxu0 0.0
        %224 = vmatprep.subr.mxu0 0.0
        %225 = vmatpush2.msra.mxu0 0.0
        %226 = vmatprep.subr.mxu0 0.0
        %227 = vmatpush2.msra.mxu0 0.0
        %228 = vmatprep.subr.mxu0 0.0
        %229 = vmatpush2.msra.mxu0 0.0
        %230 = vmatprep.subr.mxu0 0.0
        %231 = vmatpush2.msra.mxu0 0.0
        %232 = vmatprep.subr.mxu0 0.0
        %233 = vmatpush2.msra.mxu0 0.0
        %234 = vmatprep.subr.mxu0 0.0
        %235 = vmatpush2.msra.mxu0 0.0
        %236 = vmatprep.subr.mxu0 0.0
        %237 = vmatpush2.msra.mxu0 0.0
        %238 = vmatprep.subr.mxu0 0.0
        %239 = vmatpush2.msra.mxu0 0.0
        %240 = vmatprep.subr.mxu0 0.0
        %241 = vmatpush2.msra.mxu0 0.0
        %242 = vmatprep.subr.mxu0 0.0
        %243 = vmatpush2.msra.mxu0 0.0
        %244 = vmatprep.mubr.f32.mxu0 0.0
        %245 = vmatmul.mubr.f32.gmra.mxu0 %v175
        %v246 = vpop.f32.mrf.mxu0
        %v247 = vadd.f32 0.0, %v246
        %v248 = vpop.f32.mrf.mxu0
        %249 = vdwg.mxu0
        %v251 = vsel %vm173, %v167, 0
        %v253 = vsel %vm177, %v166, 0
        %255 = vmatprep.subr.mxu0 0.0
        %256 = vmatpush1.msra.mxu0 0.0
        %257 = vmatprep.subr.mxu0 0.0
        %258 = vmatpush1.msra.mxu0 0.0
        %259 = vmatprep.subr.mxu0 0.0
        %260 = vmatpush1.msra.mxu0 0.0
        %261 = vmatprep.subr.mxu0 0.0
        %262 = vmatpush1.msra.mxu0 0.0
        %263 = vmatprep.subr.mxu0 0.0
        %264 = vmatpush1.msra.mxu0 0.0
        %265 = vmatprep.subr.mxu0 0.0
        %266 = vmatpush1.msra.mxu0 0.0
        %267 = vmatprep.subr.mxu0 0.0
        %268 = vmatpush1.msra.mxu0 0.0
        %269 = vmatprep.subr.mxu0 0.0
        %270 = vmatpush1.msra.mxu0 0.0
        %271 = vmatprep.subr.mxu0 0.0
        %272 = vmatpush1.msra.mxu0 0.0
        %273 = vmatprep.subr.mxu0 0.0
        %274 = vmatpush1.msra.mxu0 0.0
        %275 = vmatprep.subr.mxu0 0.0
        %276 = vmatpush1.msra.mxu0 0.0
        %277 = vmatprep.subr.mxu0 0.0
        %278 = vmatpush1.msra.mxu0 0.0
        %279 = vmatprep.subr.mxu0 0.0
        %280 = vmatpush1.msra.mxu0 0.0
        %281 = vmatprep.subr.mxu0 0.0
        %282 = vmatpush1.msra.mxu0 0.0
        %283 = vmatprep.subr.mxu0 0.0
        %284 = vmatpush1.msra.mxu0 0.0
        %285 = vmatprep.subr.mxu0 0.0
        %286 = vmatpush1.msra.mxu0 %v253
        %287 = vmatprep.subr.mxu0 0.0
        %288 = vmatpush2.msra.mxu0 0.0
        %289 = vmatprep.subr.mxu0 0.0
        %290 = vmatpush2.msra.mxu0 0.0
        %291 = vmatprep.subr.mxu0 0.0
        %292 = vmatpush2.msra.mxu0 0.0
        %293 = vmatprep.subr.mxu0 0.0
        %294 = vmatpush2.msra.mxu0 0.0
        %295 = vmatprep.subr.mxu0 0.0
        %296 = vmatpush2.msra.mxu0 0.0
        %297 = vmatprep.subr.mxu0 0.0
        %298 = vmatpush2.msra.mxu0 0.0
        %299 = vmatprep.subr.mxu0 0.0
        %300 = vmatpush2.msra.mxu0 0.0
        %301 = vmatprep.subr.mxu0 0.0
        %302 = vmatpush2.msra.mxu0 0.0
        %303 = vmatprep.subr.mxu0 0.0
        %304 = vmatpush2.msra.mxu0 0.0
        %305 = vmatprep.subr.mxu0 0.0
        %306 = vmatpush2.msra.mxu0 0.0
        %307 = vmatprep.subr.mxu0 0.0
        %308 = vmatpush2.msra.mxu0 0.0
        %309 = vmatprep.subr.mxu0 0.0
        %310 = vmatpush2.msra.mxu0 0.0
        %311 = vmatprep.subr.mxu0 0.0
        %312 = vmatpush2.msra.mxu0 0.0
        %313 = vmatprep.subr.mxu0 0.0
        %314 = vmatpush2.msra.mxu0 0.0
        %315 = vmatprep.subr.mxu0 0.0
        %316 = vmatpush2.msra.mxu0 0.0
        %317 = vmatprep.subr.mxu0 0.0
        %318 = vmatpush2.msra.mxu0 0.0
        %319 = vmatprep.mubr.f32.mxu0 0.0
        %320 = vmatmul.mubr.f32.gmra.mxu0 %v251
        %v321 = vpop.f32.mrf.mxu0
        %v322 = vadd.f32 %v247, %v321
        %v323 = vpop.f32.mrf.mxu0
        %324 = vdwg.mxu0
        %s325 = scalar_lea.vmem %s1, 16
        %v326 = vld [vmem:[%s325] sm:$0xff]
        %327 = vrot.lane.b32.xlu0 %v166, 126
        %v328 = vpop.permute.xlu0 %327
        %v330 = vsel %vm173, %v326, 0
        %v332 = vsel %vm177, %v328, 0
        %334 = vmatprep.subr.mxu0 0.0
        %335 = vmatpush1.msra.mxu0 0.0
        %336 = vmatprep.subr.mxu0 0.0
        %337 = vmatpush1.msra.mxu0 0.0
        %338 = vmatprep.subr.mxu0 0.0
        %339 = vmatpush1.msra.mxu0 0.0
        %340 = vmatprep.subr.mxu0 0.0
        %341 = vmatpush1.msra.mxu0 0.0
        %342 = vmatprep.subr.mxu0 0.0
        %343 = vmatpush1.msra.mxu0 0.0
        %344 = vmatprep.subr.mxu0 0.0
        %345 = vmatpush1.msra.mxu0 0.0
        %346 = vmatprep.subr.mxu0 0.0
        %347 = vmatpush1.msra.mxu0 0.0
        %348 = vmatprep.subr.mxu0 0.0
        %349 = vmatpush1.msra.mxu0 0.0
        %350 = vmatprep.subr.mxu0 0.0
        %351 = vmatpush1.msra.mxu0 0.0
        %352 = vmatprep.subr.mxu0 0.0
        %353 = vmatpush1.msra.mxu0 0.0
        %354 = vmatprep.subr.mxu0 0.0
        %355 = vmatpush1.msra.mxu0 0.0
        %356 = vmatprep.subr.mxu0 0.0
        %357 = vmatpush1.msra.mxu0 0.0
        %358 = vmatprep.subr.mxu0 0.0
        %359 = vmatpush1.msra.mxu0 0.0
        %360 = vmatprep.subr.mxu0 0.0
        %361 = vmatpush1.msra.mxu0 0.0
        %362 = vmatprep.subr.mxu0 0.0
        %363 = vmatpush1.msra.mxu0 0.0
        %364 = vmatprep.subr.mxu0 0.0
        %365 = vmatpush1.msra.mxu0 %v332
        %366 = vmatprep.subr.mxu0 0.0
        %367 = vmatpush2.msra.mxu0 0.0
        %368 = vmatprep.subr.mxu0 0.0
        %369 = vmatpush2.msra.mxu0 0.0
        %370 = vmatprep.subr.mxu0 0.0
        %371 = vmatpush2.msra.mxu0 0.0
        %372 = vmatprep.subr.mxu0 0.0
        %373 = vmatpush2.msra.mxu0 0.0
        %374 = vmatprep.subr.mxu0 0.0
        %375 = vmatpush2.msra.mxu0 0.0
        %376 = vmatprep.subr.mxu0 0.0
        %377 = vmatpush2.msra.mxu0 0.0
        %378 = vmatprep.subr.mxu0 0.0
        %379 = vmatpush2.msra.mxu0 0.0
        %380 = vmatprep.subr.mxu0 0.0
        %381 = vmatpush2.msra.mxu0 0.0
        %382 = vmatprep.subr.mxu0 0.0
        %383 = vmatpush2.msra.mxu0 0.0
        %384 = vmatprep.subr.mxu0 0.0
        %385 = vmatpush2.msra.mxu0 0.0
        %386 = vmatprep.subr.mxu0 0.0
        %387 = vmatpush2.msra.mxu0 0.0
        %388 = vmatprep.subr.mxu0 0.0
        %389 = vmatpush2.msra.mxu0 0.0
        %390 = vmatprep.subr.mxu0 0.0
        %391 = vmatpush2.msra.mxu0 0.0
        %392 = vmatprep.subr.mxu0 0.0
        %393 = vmatpush2.msra.mxu0 0.0
        %394 = vmatprep.subr.mxu0 0.0
        %395 = vmatpush2.msra.mxu0 0.0
        %396 = vmatprep.subr.mxu0 0.0
        %397 = vmatpush2.msra.mxu0 0.0
        %398 = vmatprep.mubr.f32.mxu0 0.0
        %399 = vmatmul.mubr.f32.gmra.mxu0 %v330
        %v400 = vpop.f32.mrf.mxu0
        %v401 = vadd.f32 0.0, %v400
        %v402 = vpop.f32.mrf.mxu0
        %403 = vdwg.mxu0
        %v404 = vadd.f32 %v322, %v401
        %s405 = scalar_lea.vmem %s1, 24
        %v406 = vld [vmem:[%s405] sm:$0xff]
        %407 = vrot.lane.b32.xlu0 %v166, 125
        %v408 = vpop.permute.xlu0 %407
        %v410 = vsel %vm173, %v406, 0
        %v412 = vsel %vm177, %v408, 0
        %414 = vmatprep.subr.mxu0 0.0
        %415 = vmatpush1.msra.mxu0 0.0
        %416 = vmatprep.subr.mxu0 0.0
        %417 = vmatpush1.msra.mxu0 0.0
        %418 = vmatprep.subr.mxu0 0.0
        %419 = vmatpush1.msra.mxu0 0.0
        %420 = vmatprep.subr.mxu0 0.0
        %421 = vmatpush1.msra.mxu0 0.0
        %422 = vmatprep.subr.mxu0 0.0
        %423 = vmatpush1.msra.mxu0 0.0
        %424 = vmatprep.subr.mxu0 0.0
        %425 = vmatpush1.msra.mxu0 0.0
        %426 = vmatprep.subr.mxu0 0.0
        %427 = vmatpush1.msra.mxu0 0.0
        %428 = vmatprep.subr.mxu0 0.0
        %429 = vmatpush1.msra.mxu0 0.0
        %430 = vmatprep.subr.mxu0 0.0
        %431 = vmatpush1.msra.mxu0 0.0
        %432 = vmatprep.subr.mxu0 0.0
        %433 = vmatpush1.msra.mxu0 0.0
        %434 = vmatprep.subr.mxu0 0.0
        %435 = vmatpush1.msra.mxu0 0.0
        %436 = vmatprep.subr.mxu0 0.0
        %437 = vmatpush1.msra.mxu0 0.0
        %438 = vmatprep.subr.mxu0 0.0
        %439 = vmatpush1.msra.mxu0 0.0
        %440 = vmatprep.subr.mxu0 0.0
        %441 = vmatpush1.msra.mxu0 0.0
        %442 = vmatprep.subr.mxu0 0.0
        %443 = vmatpush1.msra.mxu0 0.0
        %444 = vmatprep.subr.mxu0 0.0
        %445 = vmatpush1.msra.mxu0 %v412
        %446 = vmatprep.subr.mxu0 0.0
        %447 = vmatpush2.msra.mxu0 0.0
        %448 = vmatprep.subr.mxu0 0.0
        %449 = vmatpush2.msra.mxu0 0.0
        %450 = vmatprep.subr.mxu0 0.0
        %451 = vmatpush2.msra.mxu0 0.0
        %452 = vmatprep.subr.mxu0 0.0
        %453 = vmatpush2.msra.mxu0 0.0
        %454 = vmatprep.subr.mxu0 0.0
        %455 = vmatpush2.msra.mxu0 0.0
        %456 = vmatprep.subr.mxu0 0.0
        %457 = vmatpush2.msra.mxu0 0.0
        %458 = vmatprep.subr.mxu0 0.0
        %459 = vmatpush2.msra.mxu0 0.0
        %460 = vmatprep.subr.mxu0 0.0
        %461 = vmatpush2.msra.mxu0 0.0
        %462 = vmatprep.subr.mxu0 0.0
        %463 = vmatpush2.msra.mxu0 0.0
        %464 = vmatprep.subr.mxu0 0.0
        %465 = vmatpush2.msra.mxu0 0.0
        %466 = vmatprep.subr.mxu0 0.0
        %467 = vmatpush2.msra.mxu0 0.0
        %468 = vmatprep.subr.mxu0 0.0
        %469 = vmatpush2.msra.mxu0 0.0
        %470 = vmatprep.subr.mxu0 0.0
        %471 = vmatpush2.msra.mxu0 0.0
        %472 = vmatprep.subr.mxu0 0.0
        %473 = vmatpush2.msra.mxu0 0.0
        %474 = vmatprep.subr.mxu0 0.0
        %475 = vmatpush2.msra.mxu0 0.0
        %476 = vmatprep.subr.mxu0 0.0
        %477 = vmatpush2.msra.mxu0 0.0
        %478 = vmatprep.mubr.f32.mxu0 0.0
        %479 = vmatmul.mubr.f32.gmra.mxu0 %v410
        %v480 = vpop.f32.mrf.mxu0
        %v481 = vadd.f32 0.0, %v480
        %v482 = vpop.f32.mrf.mxu0
        %483 = vdwg.mxu0
        %v484 = vadd.f32 %v404, %v481
        %s485 = scalar_lea.vmem %s1, 32
        %v486 = vld [vmem:[%s485] sm:$0xff]
        %487 = vrot.lane.b32.xlu0 %v166, 124
        %v488 = vpop.permute.xlu0 %487
        %v490 = vsel %vm173, %v486, 0
        %v492 = vsel %vm177, %v488, 0
        %494 = vmatprep.subr.mxu0 0.0
        %495 = vmatpush1.msra.mxu0 0.0
        %496 = vmatprep.subr.mxu0 0.0
        %497 = vmatpush1.msra.mxu0 0.0
        %498 = vmatprep.subr.mxu0 0.0
        %499 = vmatpush1.msra.mxu0 0.0
        %500 = vmatprep.subr.mxu0 0.0
        %501 = vmatpush1.msra.mxu0 0.0
        %502 = vmatprep.subr.mxu0 0.0
        %503 = vmatpush1.msra.mxu0 0.0
        %504 = vmatprep.subr.mxu0 0.0
        %505 = vmatpush1.msra.mxu0 0.0
        %506 = vmatprep.subr.mxu0 0.0
        %507 = vmatpush1.msra.mxu0 0.0
        %508 = vmatprep.subr.mxu0 0.0
        %509 = vmatpush1.msra.mxu0 0.0
        %510 = vmatprep.subr.mxu0 0.0
        %511 = vmatpush1.msra.mxu0 0.0
        %512 = vmatprep.subr.mxu0 0.0
        %513 = vmatpush1.msra.mxu0 0.0
        %514 = vmatprep.subr.mxu0 0.0
        %515 = vmatpush1.msra.mxu0 0.0
        %516 = vmatprep.subr.mxu0 0.0
        %517 = vmatpush1.msra.mxu0 0.0
        %518 = vmatprep.subr.mxu0 0.0
        %519 = vmatpush1.msra.mxu0 0.0
        %520 = vmatprep.subr.mxu0 0.0
        %521 = vmatpush1.msra.mxu0 0.0
        %522 = vmatprep.subr.mxu0 0.0
        %523 = vmatpush1.msra.mxu0 0.0
        %524 = vmatprep.subr.mxu0 0.0
        %525 = vmatpush1.msra.mxu0 %v492
        %526 = vmatprep.subr.mxu0 0.0
        %527 = vmatpush2.msra.mxu0 0.0
        %528 = vmatprep.subr.mxu0 0.0
        %529 = vmatpush2.msra.mxu0 0.0
        %530 = vmatprep.subr.mxu0 0.0
        %531 = vmatpush2.msra.mxu0 0.0
        %532 = vmatprep.subr.mxu0 0.0
        %533 = vmatpush2.msra.mxu0 0.0
        %534 = vmatprep.subr.mxu0 0.0
        %535 = vmatpush2.msra.mxu0 0.0
        %536 = vmatprep.subr.mxu0 0.0
        %537 = vmatpush2.msra.mxu0 0.0
        %538 = vmatprep.subr.mxu0 0.0
        %539 = vmatpush2.msra.mxu0 0.0
        %540 = vmatprep.subr.mxu0 0.0
        %541 = vmatpush2.msra.mxu0 0.0
        %542 = vmatprep.subr.mxu0 0.0
        %543 = vmatpush2.msra.mxu0 0.0
        %544 = vmatprep.subr.mxu0 0.0
        %545 = vmatpush2.msra.mxu0 0.0
        %546 = vmatprep.subr.mxu0 0.0
        %547 = vmatpush2.msra.mxu0 0.0
        %548 = vmatprep.subr.mxu0 0.0
        %549 = vmatpush2.msra.mxu0 0.0
        %550 = vmatprep.subr.mxu0 0.0
        %551 = vmatpush2.msra.mxu0 0.0
        %552 = vmatprep.subr.mxu0 0.0
        %553 = vmatpush2.msra.mxu0 0.0
        %554 = vmatprep.subr.mxu0 0.0
        %555 = vmatpush2.msra.mxu0 0.0
        %556 = vmatprep.subr.mxu0 0.0
        %557 = vmatpush2.msra.mxu0 0.0
        %558 = vmatprep.mubr.f32.mxu0 0.0
        %559 = vmatmul.mubr.f32.gmra.mxu0 %v490
        %v560 = vpop.f32.mrf.mxu0
        %v561 = vadd.f32 0.0, %v560
        %v562 = vpop.f32.mrf.mxu0
        %563 = vdwg.mxu0
        %v564 = vadd.f32 %v484, %v561
        %v565 = vld [vmem:[%s2] sm:$0xff]
        %567 = vset.pattern.permute.xlu0 0
        %568 = vperm.xlu0 %567, %v565
        %v569 = vpop.permute.xlu0 %568
        %v571 = vadd.f32 %v564, %v569
        %vm572 = vcmask 261120
        %573 = vst.msk [vmem:[%s161] sm:$0xff] %vm572, %v571
        %s574 = sand.u32 %s93, 1
        %s575 = scalar_lea.sflag [#allocation3], %s574
        %s576 = sand.u32 %s93, 1
        %s577 = smul.addr %s576, 8
        %s578 = scalar_lea.vmem [#allocation2], %s577
        // Predicated region
        $region33: #{tpu_custom_call.1} parent=31 // pred_check
          %p579 = pneg %p103
        $region34: #{tpu_custom_call.1} parent=31 // pred_check_branch
          %581 = sbr.rel (%p579) target = $region36
        $region35: #{tpu_custom_call.1} parent=31 // pred_region
          %s583 = ssub.s32 128, 128
          %584 = vsyncadd %s575, %s583
          %s585 = smul.addr %s17, 128
          %s586 = scalar_lea.hbm %s3, %s585
          %s588 = sshll.u32 %s578, 4
          %s589 = int_to_ptr.vmem [resolvable:$true] %s588
          %591 = dma.vmem_to_hbm [thread:$0]  %s589, 128, %s586, %s575
        $region36: #{tpu_custom_call.1} parent=31 // pred_fallthru
          _
      $region32: #{tpu_custom_call.1} parent=5 // pred_fallthru
        _
      %p592 = scmp.le.s32.totalorder 2, %s12
      // Predicated region
      $region37: #{tpu_custom_call.1} parent=5 // pred_check
        %p593 = pneg %p592
      $region38: #{tpu_custom_call.1} parent=5 // pred_check_branch
        %595 = sbr.rel (%p593) target = $region40
      $region39: #{tpu_custom_call.1} parent=5 // pred_region
        %s596 = ssub.s32 %s12, 2
        // Predicated region
        $region41: #{tpu_custom_call.1} parent=39 // pred_check
          %p597 = pneg %p109
        $region42: #{tpu_custom_call.1} parent=39 // pred_check_branch
          %599 = sbr.rel (%p597) target = $region44
        $region43: #{tpu_custom_call.1} parent=39 // pred_region
          %s600 = sand.u32 %s94, 1
          %s601 = scalar_lea.sflag [#allocation3], %s600
          %s602 = sand.u32 %s94, 1
          %s603 = smul.addr %s602, 8
          %s604 = scalar_lea.vmem [#allocation2], %s603
          %605 = dma.done %s601, 128
        $region44: #{tpu_custom_call.1} parent=39 // pred_fallthru
          _
      $region40: #{tpu_custom_call.1} parent=5 // pred_fallthru
        _
    $region6: #{tpu_custom_call.1} parent=1 // loop_footer
      %s16 = sadd.s32 1, %s12
    $region7: #{tpu_custom_call.1} parent=1 // loop_footer_branch
      %11 = sbr.rel target = $region3
    $region8: #{tpu_custom_call.1} parent=1 // loop_exit
      _
    %606 = vsyncpa [#allocation3], 1
    %s607 = scalar_lea.sflag [#allocation3], 1
    %608 = vsyncpa %s607, 1

</llo_original>
